<compile_context>
chip_gen: v7x
topology: tpu7x:2x2x1
jax: 0.10.0
libtpu: 0.0.40
codegen_flags: <defaults>
</compile_context>

<pallas_src>
import functools

import jax
import jax.numpy as jnp
from jax import lax
from jax.experimental import pallas as pl
from jax.experimental.pallas import tpu as pltpu


def _round_up(x, m):
    return ((x + m - 1) // m) * m


def _ce_softmax_kernel(logits_ref, tgt_ref, nll_ref, *, num_rows):
    """One (tm, C) tile of rows -> (tm, 1) per-row NLL (masked past num_rows)."""
    i = pl.program_id(0)
    tm = logits_ref.shape[0]

    x = logits_ref[...].astype(jnp.float32)                       # (tm, C)

    # softmax over class dim (== v_p.softmax(dim=-1))
    m = jnp.max(x, axis=-1, keepdims=True)
    e = jnp.exp(x - m)
    p = e * pl.reciprocal(jnp.sum(e, axis=-1, keepdims=True), approx=False)

    # CrossEntropy(log_softmax(p), t): nll = logsumexp_C(p) - p[target]
    # p ∈ [0, 1] -> no max-subtraction needed for the second logsumexp.
    lse = jnp.log(jnp.sum(jnp.exp(p), axis=-1, keepdims=True))    # (tm, 1)

    tgt = tgt_ref[...]                                            # (tm, 1) int32
    cols = lax.broadcasted_iota(jnp.int32, p.shape, 1)
    p_t = jnp.sum(jnp.where(cols == tgt, p, 0.0),
                  axis=-1, keepdims=True)                         # (tm, 1)
    nll = lse - p_t                                               # (tm, 1)

    # Mask rows of the padded final tile so they contribute exactly 0.
    row = i * tm + lax.broadcasted_iota(jnp.int32, (tm, 1), 0)
    nll_ref[...] = jnp.where(row < num_rows, nll, 0.0)


def ce_softmax_loss(v_p, v, *, tm=None):
    """v_p: (B, N, C) float logits; v: (B, N, 1) class indices. Returns (1,) f32."""
    B, N, C = v_p.shape
    assert v.shape == (B, N, 1)
    M = B * N

    itemsize = jnp.dtype(v_p.dtype).itemsize
    sub = 8 if itemsize >= 4 else 16          # min sublane granularity (f32 / bf16)
    if tm is None:
        # ~4 MiB per logits tile (x2 for double buffering = ~8 MiB), well inside
        # a 32 MiB scoped VMEM limit on v5e/v6e/v7x.
        budget = 4 * 1024 * 1024
        tm = (budget // max(1, C * itemsize)) // sub * sub
        tm = max(sub, min(1024, tm))
    tm = max(sub, min(tm, _round_up(M, sub)))
    tm = _round_up(tm, sub)
    num_blocks = pl.cdiv(M, tm)

    logits = v_p.reshape(M, C)                 # keep original dtype through the DMA
    tgt = v.reshape(M, 1).astype(jnp.int32)    # torch `.long()`

    kernel = functools.partial(_ce_softmax_kernel, num_rows=M)

    nll = pl.pallas_call(
        kernel,
        out_shape=jax.ShapeDtypeStruct((num_blocks * tm, 1), jnp.float32),
        grid_spec=pltpu.PrefetchScalarGridSpec(
            num_scalar_prefetch=0,
            grid=(num_blocks,),
            in_specs=[
                pl.BlockSpec((tm, C), lambda i: (i, 0)),
                pl.BlockSpec((tm, 1), lambda i: (i, 0)),
            ],
            out_specs=pl.BlockSpec((tm, 1), lambda i: (i, 0)),
        ),
        compiler_params=pltpu.CompilerParams(
            dimension_semantics=("parallel",),
            vmem_limit_bytes=32 * 1024 * 1024,
        ),
    )(logits, tgt)

    # reduction='mean' over all B*N positions, then .unsqueeze(-1) -> shape (1,)
    return (jnp.sum(nll) / jnp.float32(M)).reshape(1)


def _ref_ce_softmax_loss(v_p, v):
    # Pure-JAX reference for sanity checking.
    B, N, C = v_p.shape
    t = v.reshape(B, N).astype(jnp.int32)
    p = jax.nn.softmax(v_p.astype(jnp.float32), axis=-1)
    logp = jax.nn.log_softmax(p, axis=-1)
    nll = -jnp.take_along_axis(logp, t[..., None], axis=-1)[..., 0]
    return jnp.mean(nll).reshape(1)


if __name__ == "__main__":
    key = jax.random.PRNGKey(0)
    k1, k2, k3, k4 = jax.random.split(key, 4)

    # Case 1: small shapes matching the module's (B, N, C) logits / (B, N, 1) targets.
    B, N, C = 2, 8, 32
    v_p = jax.random.normal(k1, (B, N, C), dtype=jnp.float32)
    v = jax.random.randint(k2, (B, N, 1), 0, C).astype(jnp.float32)  # module casts with .long()

    loss = jax.block_until_ready(ce_softmax_loss(v_p, v))
    ref = jax.block_until_ready(_ref_ce_softmax_loss(v_p, v))
    assert loss.shape == (1,)
    assert jnp.allclose(loss, ref, rtol=1e-5, atol=1e-5), (loss, ref)

    # Case 2: row count not divisible by the tile -> exercises the tail mask.
    B2, N2, C2 = 2, 10, 32
    v_p2 = jax.random.normal(k3, (B2, N2, C2), dtype=jnp.float32)
    v2 = jax.random.randint(k4, (B2, N2, 1), 0, C2).astype(jnp.float32)
    loss2 = jax.block_until_ready(ce_softmax_loss(v_p2, v2, tm=8))
    ref2 = jax.block_until_ready(_ref_ce_softmax_loss(v_p2, v2))
    assert jnp.allclose(loss2, ref2, rtol=1e-5, atol=1e-5), (loss2, ref2)

    print("KERNEL_OK")
</pallas_src>

<mosaic_0001>
module attributes {stable_mosaic.version = 11 : i64} {
  func.func @_ce_softmax_kernel(%arg0: i32, %arg1: memref<16x32xf32, #tpu.memory_space<vmem>>, %arg2: memref<16x1xi32, #tpu.memory_space<vmem>>, %arg3: memref<16x1xf32, #tpu.memory_space<vmem>>) attributes {dimension_semantics = [#tpu.dimension_semantics<parallel>], iteration_bounds = array<i64: 1>, scalar_prefetch = 0 : i64, scratch_operands = 0 : i64, tpu.core_type = #tpu.core_type<tc>, window_params = [{transform_indices = @transform_0, window_bounds = array<i64: 16, 32>}, {transform_indices = @transform_1, window_bounds = array<i64: 16, 1>}, {transform_indices = @transform_2, window_bounds = array<i64: 16, 1>}]} {
    %c0 = arith.constant 0 : index
    %c0_0 = arith.constant 0 : index
    %0 = vector.load %arg1[%c0, %c0_0] : memref<16x32xf32, #tpu.memory_space<vmem>>, vector<16x32xf32>
    %cst = arith.constant dense<0xFF800000> : vector<16xf32>
    %1 = vector.multi_reduction <maximumf>, %0, %cst [1] : vector<16x32xf32> to vector<16xf32>
    %2 = vector.shape_cast %1 : vector<16xf32> to vector<16x1xf32>
    %3 = vector.broadcast %2 : vector<16x1xf32> to vector<16x32xf32>
    %4 = arith.subf %0, %3 : vector<16x32xf32>
    %5 = math.exp %4 : vector<16x32xf32>
    %cst_1 = arith.constant dense<0.000000e+00> : vector<16xf32>
    %6 = vector.multi_reduction <add>, %5, %cst_1 [1] : vector<16x32xf32> to vector<16xf32>
    %7 = vector.shape_cast %6 : vector<16xf32> to vector<16x1xf32>
    %8 = tpu.reciprocal %7 : vector<16x1xf32> -> vector<16x1xf32>
    %9 = vector.broadcast %8 : vector<16x1xf32> to vector<16x32xf32>
    %10 = arith.mulf %5, %9 : vector<16x32xf32>
    %11 = math.exp %10 : vector<16x32xf32>
    %cst_2 = arith.constant dense<0.000000e+00> : vector<16xf32>
    %12 = vector.multi_reduction <add>, %11, %cst_2 [1] : vector<16x32xf32> to vector<16xf32>
    %13 = vector.shape_cast %12 : vector<16xf32> to vector<16x1xf32>
    %14 = math.log %13 : vector<16x1xf32>
    %c0_3 = arith.constant 0 : index
    %c0_4 = arith.constant 0 : index
    %15 = vector.load %arg2[%c0_3, %c0_4] : memref<16x1xi32, #tpu.memory_space<vmem>>, vector<16x1xi32>
    %16 = tpu.iota {dimensions = array<i32: 1>} : vector<16x32xi32>
    %17 = vector.broadcast %15 : vector<16x1xi32> to vector<16x32xi32>
    %18 = arith.cmpi eq, %16, %17 : vector<16x32xi32>
    %cst_5 = arith.constant 0.000000e+00 : f32
    %19 = vector.broadcast %cst_5 : f32 to vector<16x32xf32>
    %20 = arith.select %18, %10, %19 : vector<16x32xi1>, vector<16x32xf32>
    %cst_6 = arith.constant dense<0.000000e+00> : vector<16xf32>
    %21 = vector.multi_reduction <add>, %20, %cst_6 [1] : vector<16x32xf32> to vector<16xf32>
    %22 = vector.shape_cast %21 : vector<16xf32> to vector<16x1xf32>
    %23 = arith.subf %14, %22 : vector<16x1xf32>
    %c16_i32 = arith.constant 16 : i32
    %24 = arith.muli %arg0, %c16_i32 : i32
    %25 = tpu.iota {dimensions = array<i32: 0>} : vector<16x1xi32>
    %26 = vector.broadcast %24 : i32 to vector<16x1xi32>
    %27 = arith.addi %26, %25 : vector<16x1xi32>
    %c16_i32_7 = arith.constant 16 : i32
    %28 = vector.broadcast %c16_i32_7 : i32 to vector<16x1xi32>
    %29 = arith.cmpi slt, %27, %28 : vector<16x1xi32>
    %cst_8 = arith.constant 0.000000e+00 : f32
    %30 = vector.broadcast %cst_8 : f32 to vector<16x1xf32>
    %31 = arith.select %29, %23, %30 : vector<16x1xi1>, vector<16x1xf32>
    %c0_9 = arith.constant 0 : index
    %c0_10 = arith.constant 0 : index
    %32 = vector.load %arg3[%c0_9, %c0_10] : memref<16x1xf32, #tpu.memory_space<vmem>>, vector<16x1xf32>
    tpu.vector_store %arg3[%c0_9, %c0_10], %31 {strides = array<i32>} : memref<16x1xf32, #tpu.memory_space<vmem>>, vector<16x1xf32>,
    return
  }
  func.func @transform_0(%arg0: i32) -> (i32, i32) {
    %c0_i32 = arith.constant 0 : i32
    %c0_i32_0 = arith.constant 0 : i32
    return %arg0, %c0_i32 : i32, i32
  }
  func.func @transform_1(%arg0: i32) -> (i32, i32) {
    %c0_i32 = arith.constant 0 : i32
    %c0_i32_0 = arith.constant 0 : i32
    return %arg0, %c0_i32 : i32, i32
  }
  func.func @transform_2(%arg0: i32) -> (i32, i32) {
    %c0_i32 = arith.constant 0 : i32
    %c0_i32_0 = arith.constant 0 : i32
    return %arg0, %c0_i32 : i32, i32
  }
}

</mosaic_0001>

<llo_original>
// kernel: tpu_custom_call.1
$region0: #{tpu_custom_call.1}
  #allocation0 [shape = 'u32[]', space=smem, size = 0x4, offset = 0x4, fixed_abs, tag = 'smem constant byte address 0x4 - core index']
  #allocation1 [shape = 'u32[144,128]{1,0:T(1,128)}', space=vmem, size = 0x12000, scoped, tag = 'internal scratch']
  %s0 = inlined_call_operand.vmem [shape: f32[16,32], index: 0, kind: input, shape index: {}]
  %s1 = inlined_call_operand.vmem [shape: s32[16,1], index: 1, kind: input, shape index: {}]
  %s2 = inlined_call_operand.vmem [shape: f32[16,1], index: 2, kind: output, shape index: {}]
  %s3 = sld [smem:[#allocation0]]
  $region18: #{tpu_custom_call.1} parent=0
    _
  %s5 = ssub.s32 1, %s3
  %s6 = scalar_select 0, %s5, %s3
  // Predicated region
  $region2: #{tpu_custom_call.1} parent=0 // pred_check
    _
  $region3: #{tpu_custom_call.1} parent=0 // pred_check_branch
    %8 = sbr.rel (0) target = $region5
  $region4: #{tpu_custom_call.1} parent=0 // pred_region
    _
  $region5: #{tpu_custom_call.1} parent=0 // pred_fallthru
    _
  // Predicated region
  $region6: #{tpu_custom_call.1} parent=0 // pred_check
    _
  $region7: #{tpu_custom_call.1} parent=0 // pred_check_branch
    %10 = sbr.rel (0) target = $region9
  $region8: #{tpu_custom_call.1} parent=0 // pred_region
    _
  $region9: #{tpu_custom_call.1} parent=0 // pred_fallthru
    _
  %v11 = vld [vmem:[%s0] sm:$0xff]
  %v12 = vld [vmem:[%s0 + $0x8] sm:$0xff]
  %vm13 = vcmask 261120
  %v14 = vsel %vm13, %v11, -inf
  %15 = vmax.xlane.f32.xlu0 %v14
  %v16 = vpop.xlane.xlu0 %15
  %v17 = vsel %vm13, %v12, -inf
  %18 = vmax.xlane.f32.xlu0 %v17
  %v19 = vpop.xlane.xlu0 %18
  %v20 = vsub.f32 %v11, %v16
  %v21 = vsub.f32 %v12, %v19
  %v22 = vmul.f32 %v20, 1.442695
  %v23 = vpow.pop %v22
  %v24 = vmul.f32 %v21, 1.442695
  %v25 = vpow.pop %v24
  %v26 = vsel %vm13, %v23, 0.0
  %27 = vadd.xlane.f32.xlu0 %v26
  %v28 = vpop.xlane.xlu0 %27
  %v29 = vsel %vm13, %v25, 0.0
  %30 = vadd.xlane.f32.xlu0 %v29
  %v31 = vpop.xlane.xlu0 %30
  %v32 = vrcp.pop %v28
  %v33 = vrcp.pop %v31
  %v34 = vmul.f32 %v23, %v32
  %v35 = vmul.f32 %v25, %v33
  %v36 = vmul.f32 %v34, 1.442695
  %v37 = vpow.pop %v36
  %v38 = vmul.f32 %v35, 1.442695
  %v39 = vpow.pop %v38
  %v40 = vsel %vm13, %v37, 0.0
  %41 = vadd.xlane.f32.xlu0 %v40
  %v42 = vpop.xlane.xlu0 %41
  %v43 = vsel %vm13, %v39, 0.0
  %44 = vadd.xlane.f32.xlu0 %v43
  %v45 = vpop.xlane.xlu0 %44
  %v46 = vlog2.pop %v42
  %v47 = vmul.f32 %v46, 0.6931472
  %v48 = vlog2.pop %v45
  %v49 = vmul.f32 %v48, 0.6931472
  %v50 = vld [vmem:[%s1] sm:$0xff]
  %v51 = vld [vmem:[%s1 + $0x8] sm:$0xff]
  %v52 = vlaneseq
  %v53 = vand.u32 %v52, 127
  %54 = vset.pattern.permute.xlu0 0
  %55 = vperm.xlu0 %54, %v50
  %v56 = vpop.permute.xlu0 %55
  %57 = vset.pattern.permute.xlu0 0
  %58 = vperm.xlu0 %57, %v51
  %v59 = vpop.permute.xlu0 %58
  %vm60 = vcmp.eq.s32.totalorder %v53, %v56
  %vm61 = vcmp.eq.s32.totalorder %v53, %v59
  %v62 = vsel %vm60, %v34, 0.0
  %v63 = vsel %vm61, %v35, 0.0
  %v64 = vsel %vm13, %v62, 0.0
  %65 = vadd.xlane.f32.xlu0 %v64
  %v66 = vpop.xlane.xlu0 %65
  %v67 = vsel %vm13, %v63, 0.0
  %68 = vadd.xlane.f32.xlu0 %v67
  %v69 = vpop.xlane.xlu0 %68
  %v70 = vsub.f32 %v47, %v66
  %v71 = vsub.f32 %v49, %v69
  %s72 = smul.u32 0, 16
  %v73 = vlaneseq
  %v74 = vshrl.u32 %v73, 7
  %v75 = vadd.s32 %v74, 8
  %v76 = vstv %s72
  %v77 = vadd.s32 %v76, %v74
  %v78 = vadd.s32 %v76, %v75
  %vm79 = vcmp.lt.s32.totalorder %v77, 16
  %vm80 = vcmp.lt.s32.totalorder %v78, 16
  %v81 = vsel %vm79, %v70, 0.0
  %v82 = vsel %vm80, %v71, 0.0
  %vm83 = vcmask 7168
  %84 = vst.msk [vmem:[%s2] sm:$0xff] %vm83, %v81
  %85 = vst.msk [vmem:[%s2 + $0x8] sm:$0xff] %vm83, %v82
  // Predicated region
  $region10: #{tpu_custom_call.1} parent=0 // pred_check
    _
  $region11: #{tpu_custom_call.1} parent=0 // pred_check_branch
    %87 = sbr.rel (0) target = $region13
  $region12: #{tpu_custom_call.1} parent=0 // pred_region
    _
  $region13: #{tpu_custom_call.1} parent=0 // pred_fallthru
    _
  // Predicated region
  $region14: #{tpu_custom_call.1} parent=0 // pred_check
    _
  $region15: #{tpu_custom_call.1} parent=0 // pred_check_branch
    %89 = sbr.rel (0) target = $region17
  $region16: #{tpu_custom_call.1} parent=0 // pred_region
    _
  $region17: #{tpu_custom_call.1} parent=0 // pred_fallthru
    _

</llo_original>
